<compile_context>
chip_gen: v7x
topology: tpu7x:2x2x1
jax: 0.10.0
libtpu: 0.0.40
codegen_flags: <defaults>
</compile_context>

<pallas_src>
import math
import functools

import jax
import jax.numpy as jnp
from jax import lax
from jax.scipy.special import gammaln
from jax.experimental import pallas as pl
from jax.experimental.pallas import tpu as pltpu


# ----------------------------------------------------------------------------- blocking helpers

_MAX_ROW_BLOCK = 1024                 # bigger row tiles cut grid-step overhead (v6e feedback)
_VMEM_BUDGET = 40 * 1024 * 1024       # per-block budget: headroom inside v7x's 64 MiB physical


def _round_up(x, m):
    return ((x + m - 1) // m) * m


def _row_block_cap(bytes_per_row):
    """Largest lane-dense row tile whose VMEM footprint stays under budget (v7x re-derivation)."""
    cap = _VMEM_BUDGET // max(int(bytes_per_row), 1)
    cap = max(128, (cap // 128) * 128)
    return min(_MAX_ROW_BLOCK, cap)


def _row_blocking(m, max_block):
    """Pick a row tile tm that
       * divides m exactly (no wrapper-side padding / garbage rows),
       * is a multiple of 128 (lane-dense and (8,128)-legal when tiled),
       * yields >= 2 blocks whenever possible (keeps v7x's 2nd TensorCore busy).
    Falls back to a single full-extent block (always legal) for small / awkward m."""
    if m % 128 != 0 or m < 256:
        return m, 1
    tm = 128
    d = 256
    limit = min(max_block, m // 2)
    while d <= limit:
        if m % d == 0:
            tm = d
        d += 128
    return tm, m // tm


def _compiler_params(dim_sem, footprint_bytes):
    vmem_limit = None
    if footprint_bytes > 24 * 1024 * 1024:   # only raise the scoped limit when actually needed
        vmem_limit = int(min(max(footprint_bytes * 3 // 2, 33 * 1024 * 1024),
                             48 * 1024 * 1024))
    return pltpu.CompilerParams(dimension_semantics=dim_sem,
                                vmem_limit_bytes=vmem_limit)


# ----------------------------------------------------------------------------- fused encoder kernel

def _fused_encoder_kernel(y_ref, wl_ref, bl_ref, wb_ref, bb_ref, h1_ref, h2_ref):
    # h1 = y @ W_local + b_local  (= [k_y | K_y_flat], zero-padded to 128 lanes)
    # h2 = h1 @ W_back + b_back   (= [k_b | K_b_flat], pre time-shift)
    # Both matmuls on the MXU with fp32 accumulation; h1 never leaves VMEM between them
    # and both output tiles are full 128-lane slabs (unmasked stores).
    h1 = jnp.dot(y_ref[...], wl_ref[...], preferred_element_type=jnp.float32) + bl_ref[...]
    h1_ref[...] = h1
    h2_ref[...] = jnp.dot(h1, wb_ref[...], preferred_element_type=jnp.float32) + bb_ref[...]


def fused_encoder(y2, w_local, b_local, w_back, b_back):
    """y2:(M,N) -> (h1:(M,H1), h2:(M,H2)) in a single Pallas call (lane-dense outputs)."""
    M, N = y2.shape
    H1 = w_local.shape[1]
    H2 = w_back.shape[1]
    H1p = _round_up(H1, 128)
    H2p = _round_up(H2, 128)
    f32 = jnp.float32

    # Zero-pad the affine maps to 128-wide outputs: padded columns come out exactly 0
    # and padded W_back rows contribute 0, so slicing back is exact.
    wl = jnp.zeros((N, H1p), f32).at[:, :H1].set(w_local.astype(f32))
    bl = jnp.zeros((1, H1p), f32).at[0, :H1].set(b_local.astype(f32))
    wb = jnp.zeros((H1p, H2p), f32).at[:H1, :H2].set(w_back.astype(f32))
    bb = jnp.zeros((1, H2p), f32).at[0, :H2].set(b_back.astype(f32))

    bytes_per_row = 4 * (2 * N + 3 * H1p + 2 * H2p)
    tm, n_blk = _row_blocking(M, _row_block_cap(bytes_per_row))
    footprint = tm * bytes_per_row + 8 * (N * H1p + H1p + H1p * H2p + H2p)

    h1, h2 = pl.pallas_call(
        _fused_encoder_kernel,
        out_shape=(jax.ShapeDtypeStruct((M, H1p), f32),
                   jax.ShapeDtypeStruct((M, H2p), f32)),
        grid=(n_blk,),
        in_specs=[
            pl.BlockSpec((tm, N), lambda i: (i, 0)),      # row tile of y
            pl.BlockSpec((N, H1p), lambda i: (0, 0)),     # W_local (whole, constant block)
            pl.BlockSpec((1, H1p), lambda i: (0, 0)),     # b_local
            pl.BlockSpec((H1p, H2p), lambda i: (0, 0)),   # W_back (whole)
            pl.BlockSpec((1, H2p), lambda i: (0, 0)),     # b_back
        ],
        out_specs=(pl.BlockSpec((tm, H1p), lambda i: (i, 0)),
                   pl.BlockSpec((tm, H2p), lambda i: (i, 0))),
        compiler_params=_compiler_params(("parallel",), footprint),
    )(y2.astype(f32), wl, bl, wb, bb)
    return h1[:, :H1], h2[:, :H2]


# ----------------------------------------------------------------------------- Poisson ell kernel

def _poisson_ell_mean_kernel(n_samples, z_ref, c_ref, b_ref, yt_ref, o_ref):
    # z_ref : (S, L, tm)  all samples resident; contraction dim L on sublanes
    # c_ref : (N, L)
    # b_ref : (N, 1)      bias + log(delta), folded in the wrapper
    # yt_ref: (N, tm)     y^T tile, shared across samples
    # o_ref : (1, 1, tm)  sample-mean of the neuron-summed ell (lane-dense)
    c = c_ref[...]
    b = b_ref[...]
    yt = yt_ref[...]

    def body(s, acc):
        # log_rate^T : (N, tm) = C(N,L) . z_s(L,tm)  -- native MXU orientation.
        log_rate = jnp.dot(c, z_ref[s], preferred_element_type=jnp.float32) + b
        # TODO(synk): exp argument clamped at 30 as an overflow guard; gradients of the
        # rate term vanish past the clamp (diverges from the unclamped reference there).
        ell = yt * log_rate - jnp.exp(jnp.minimum(log_rate, 30.0))
        return acc + jnp.sum(ell, axis=0, keepdims=True)      # sublane reduce -> (1, tm)

    acc0 = jnp.zeros((1, yt.shape[-1]), jnp.float32)
    acc = lax.fori_loop(0, n_samples, body, acc0, unroll=True)
    o_ref[...] = (acc * (1.0 / n_samples))[None]               # single epilogue scale


def poisson_ell_sample_mean(y, z_s, C, bias, delta):
    """Sample-mean of the neuron-summed Poisson ell (sans -lgamma(y+1) term, added by caller).
    y:(B,T,N), z_s:(S,B,T,L) -> (B,T)."""
    S, B, T, L = z_s.shape
    N = y.shape[-1]
    M = B * T
    f32 = jnp.float32

    bytes_per_row = 4 * (2 * S * L + 4 * N + 2)
    tm, n_blk = _row_blocking(M, _row_block_cap(bytes_per_row))
    footprint = tm * bytes_per_row + 8 * (N * L + N)

    zt = jnp.transpose(z_s.reshape(S, M, L), (0, 2, 1)).astype(f32)    # (S, L, M)
    yt = y.reshape(M, N).astype(f32).T                                  # (N, M)
    b_col = (bias.astype(f32) + jnp.float32(math.log(delta))).reshape(N, 1)

    out = pl.pallas_call(
        functools.partial(_poisson_ell_mean_kernel, S),
        out_shape=jax.ShapeDtypeStruct((n_blk, 1, tm), f32),
        grid=(n_blk,),
        in_specs=[
            pl.BlockSpec((S, L, tm), lambda i: (0, 0, i)),   # all samples of this row tile
            pl.BlockSpec((N, L), lambda i: (0, 0)),          # C (whole, constant block)
            pl.BlockSpec((N, 1), lambda i: (0, 0)),          # bias + log(delta)
            pl.BlockSpec((N, tm), lambda i: (0, i)),         # y^T tile (no S-fold broadcast)
        ],
        out_specs=pl.BlockSpec((1, 1, tm), lambda i: (i, 0, 0)),
        compiler_params=_compiler_params(("parallel",), footprint),
    )(zt, C.astype(f32), b_col, yt)

    return out.reshape(M).reshape(B, T)


# ----------------------------------------------------------------------------- nl filter (plain JAX glue)

def nl_filter(k, K, n_samples, key):
    """Low-rank Gaussian posterior per time bin, Gaussian samples, KL vs N(0, I)."""
    # TODO(synk): small batched LxL inverse / Cholesky / slogdet kept in plain JAX
    # (no clean Pallas equivalent for linalg factorizations at L=8).
    B, T, L = k.shape
    I_L = jnp.eye(L, dtype=jnp.float32)
    J = I_L + jnp.einsum("btir,btjr->btij", K, K)             # posterior precision
    P = jnp.linalg.inv(J)                                      # posterior covariance
    m = jnp.einsum("btij,btj->bti", P, k)                      # posterior mean
    chol = jnp.linalg.cholesky(P)
    eps = jax.random.normal(key, (n_samples, B, T, L), dtype=jnp.float32)
    z_s = m[None] + jnp.einsum("btij,sbtj->sbti", chol, eps)
    _, logdet_J = jnp.linalg.slogdet(J)
    kl = 0.5 * (jnp.trace(P, axis1=-2, axis2=-1) + jnp.sum(m * m, axis=-1) - L + logdet_J)
    return z_s, {"kl": kl, "m_f": m, "P_f": P}


# ----------------------------------------------------------------------------- forward (use_cd=False path)

def lrssm_cobps_forward(y_obs, params, n_samples, sample_key, l2_C=0.1):
    T_enc = params["n_time_bins_enc"]
    N_enc = params["n_neurons_enc"]
    L, r_l, r_b = params["L"], params["rank_local"], params["rank_backward"]
    B = y_obs.shape[0]

    y_enc = y_obs[:, :T_enc, :N_enc]

    # p_mask_y_in = p_mask_a = p_mask_b = p_mask_apb = 0.0  =>  all Bernoulli masks are 1
    # and y_in = y_enc / (1 - 0) = y_enc; kept only for stats/API parity.
    t_mask_y_in = jnp.ones_like(y_enc)

    # --- fused local + backward encoder (single Pallas call, lane-dense outputs) ---
    h1, h2 = fused_encoder(y_enc.reshape(B * T_enc, N_enc),
                           params["W_local"], params["b_local"],
                           params["W_back"], params["b_back"])
    k_y = h1[:, :L].reshape(B, T_enc, L)
    K_y = h1[:, L:].reshape(B, T_enc, L, r_l)
    k_b = h2[:, :L].reshape(B, T_enc, L)
    K_b = h2[:, L:].reshape(B, T_enc, L, r_b)
    # TODO(synk): real xfads backward encoder is a reverse-time GRU; a linear map plus a
    # one-step backward shift (future-only information) stands in here.
    k_b = jnp.concatenate([k_b[:, 1:], jnp.zeros_like(k_b[:, :1])], axis=1)
    K_b = jnp.concatenate([K_b[:, 1:], jnp.zeros_like(K_b[:, :1])], axis=1)

    k = k_b + k_y
    K = jnp.concatenate([K_b, K_y], axis=-1)

    z_enc, stats = nl_filter(k, K, n_samples, sample_key)
    stats["t_mask_y_in"] = t_mask_y_in

    # ell over the FULL observed neuron set, encoder time window; sample-mean in-kernel.
    y_win = y_obs[:, :T_enc]
    ell_enc = poisson_ell_sample_mean(y_win, z_enc, params["C"],
                                      params["b_read"], params["delta"])
    # Constant -lgamma(y+1) Poisson term: sample- and parameter-independent, so computed
    # once in plain XLA outside the kernel (keeps parity with the torch reference values).
    ell_enc = ell_enc - gammaln(y_win + 1.0).sum(axis=-1)

    loss_s = stats["kl"] - ell_enc
    loss_s = loss_s.sum(axis=-1).mean()
    loss_s = loss_s + l2_C * jnp.sum(params["C"] ** 2)
    stats["ell"] = ell_enc
    return loss_s, z_enc, stats


# ----------------------------------------------------------------------------- main

if __name__ == "__main__":
    # sizes
    B, T_obs, N_obs = 2, 8, 16      # n_trials, n_time_bins (observed), n_neurons_obs
    T_enc, N_enc = 6, 12            # n_time_bins_enc, n_neurons_enc
    L, r_l, r_b = 8, 4, 4           # latent dim, local rank, backward rank
    S = 3                           # n_samples

    key = jax.random.PRNGKey(0)
    k_y_data, k_wl, k_bl, k_wb, k_bb, k_C, k_br, k_sample = jax.random.split(key, 8)

    params = {
        "L": L,
        "rank_local": r_l,
        "rank_backward": r_b,
        "n_time_bins_enc": T_enc,
        "n_neurons_enc": N_enc,
        "delta": 0.01,
        # local encoder: N_enc -> L*(1+r_l)
        "W_local": 0.1 * jax.random.normal(k_wl, (N_enc, L * (1 + r_l)), dtype=jnp.float32),
        "b_local": 0.01 * jax.random.normal(k_bl, (L * (1 + r_l),), dtype=jnp.float32),
        # backward encoder: L*(1+r_l) -> L*(1+r_b)
        "W_back": 0.1 * jax.random.normal(k_wb, (L * (1 + r_l), L * (1 + r_b)), dtype=jnp.float32),
        "b_back": 0.01 * jax.random.normal(k_bb, (L * (1 + r_b),), dtype=jnp.float32),
        # Poisson readout: L -> N_obs (readout_fn[-1].weight = C)
        "C": 0.1 * jax.random.normal(k_C, (N_obs, L), dtype=jnp.float32),
        "b_read": 0.01 * jax.random.normal(k_br, (N_obs,), dtype=jnp.float32),
    }

    # synthetic spike counts
    y_obs = jax.random.poisson(k_y_data, 2.0, (B, T_obs, N_obs)).astype(jnp.float32)

    loss_s, z_enc, stats = lrssm_cobps_forward(
        y_obs, params, n_samples=S, sample_key=k_sample, l2_C=0.1)

    jax.block_until_ready((loss_s, z_enc, stats["kl"], stats["ell"]))
    assert z_enc.shape == (S, B, T_enc, L)
    assert stats["kl"].shape == (B, T_enc)
    assert stats["ell"].shape == (B, T_enc)
    assert loss_s.shape == ()
    assert bool(jnp.isfinite(loss_s))
    print("KERNEL_OK")
</pallas_src>

<mosaic_0001>
module attributes {stable_mosaic.version = 11 : i64} {
  func.func @_fused_encoder_kernel(%arg0: i32, %arg1: memref<12x12xf32, #tpu.memory_space<vmem>>, %arg2: memref<12x128xf32, #tpu.memory_space<vmem>>, %arg3: memref<1x128xf32, #tpu.memory_space<vmem>>, %arg4: memref<128x128xf32, #tpu.memory_space<vmem>>, %arg5: memref<1x128xf32, #tpu.memory_space<vmem>>, %arg6: memref<12x128xf32, #tpu.memory_space<vmem>>, %arg7: memref<12x128xf32, #tpu.memory_space<vmem>>) attributes {dimension_semantics = [#tpu.dimension_semantics<parallel>], iteration_bounds = array<i64: 1>, scalar_prefetch = 0 : i64, scratch_operands = 0 : i64, tpu.core_type = #tpu.core_type<tc>, window_params = [{transform_indices = @transform_0, window_bounds = array<i64: 12, 12>}, {pipeline_mode = #tpu.pipeline_mode<synchronous>, transform_indices = @transform_1, window_bounds = array<i64: 12, 128>}, {pipeline_mode = #tpu.pipeline_mode<synchronous>, transform_indices = @transform_2, window_bounds = array<i64: 1, 128>}, {pipeline_mode = #tpu.pipeline_mode<synchronous>, transform_indices = @transform_3, window_bounds = array<i64: 128, 128>}, {pipeline_mode = #tpu.pipeline_mode<synchronous>, transform_indices = @transform_4, window_bounds = array<i64: 1, 128>}, {transform_indices = @transform_5, window_bounds = array<i64: 12, 128>}, {transform_indices = @transform_6, window_bounds = array<i64: 12, 128>}]} {
    %c0 = arith.constant 0 : index
    %c0_0 = arith.constant 0 : index
    %0 = vector.load %arg1[%c0, %c0_0] : memref<12x12xf32, #tpu.memory_space<vmem>>, vector<12x12xf32>
    %c0_1 = arith.constant 0 : index
    %c0_2 = arith.constant 0 : index
    %1 = vector.load %arg2[%c0_1, %c0_2] : memref<12x128xf32, #tpu.memory_space<vmem>>, vector<12x128xf32>
    %cst = arith.constant dense<0.000000e+00> : vector<12x128xf32>
    %2 = tpu.matmul %0, %1, %cst {dimension_numbers = #tpu.dot_dimension_numbers<[1], [0], [0], [1], [0, 0, 1, 1], [], []>} : vector<12x12xf32>, vector<12x128xf32>, vector<12x128xf32> -> vector<12x128xf32>
    %c0_3 = arith.constant 0 : index
    %c0_4 = arith.constant 0 : index
    %3 = vector.load %arg3[%c0_3, %c0_4] : memref<1x128xf32, #tpu.memory_space<vmem>>, vector<1x128xf32>
    %4 = vector.broadcast %3 : vector<1x128xf32> to vector<12x128xf32>
    %5 = arith.addf %2, %4 : vector<12x128xf32>
    %c0_5 = arith.constant 0 : index
    %c0_6 = arith.constant 0 : index
    %6 = vector.load %arg6[%c0_5, %c0_6] : memref<12x128xf32, #tpu.memory_space<vmem>>, vector<12x128xf32>
    tpu.vector_store %arg6[%c0_5, %c0_6], %5 {strides = array<i32>} : memref<12x128xf32, #tpu.memory_space<vmem>>, vector<12x128xf32>,
    %c0_7 = arith.constant 0 : index
    %c0_8 = arith.constant 0 : index
    %7 = vector.load %arg4[%c0_7, %c0_8] : memref<128x128xf32, #tpu.memory_space<vmem>>, vector<128x128xf32>
    %cst_9 = arith.constant dense<0.000000e+00> : vector<12x128xf32>
    %8 = tpu.matmul %5, %7, %cst_9 {dimension_numbers = #tpu.dot_dimension_numbers<[1], [0], [0], [1], [0, 0, 1, 1], [], []>} : vector<12x128xf32>, vector<128x128xf32>, vector<12x128xf32> -> vector<12x128xf32>
    %c0_10 = arith.constant 0 : index
    %c0_11 = arith.constant 0 : index
    %9 = vector.load %arg5[%c0_10, %c0_11] : memref<1x128xf32, #tpu.memory_space<vmem>>, vector<1x128xf32>
    %10 = vector.broadcast %9 : vector<1x128xf32> to vector<12x128xf32>
    %11 = arith.addf %8, %10 : vector<12x128xf32>
    %c0_12 = arith.constant 0 : index
    %c0_13 = arith.constant 0 : index
    %12 = vector.load %arg7[%c0_12, %c0_13] : memref<12x128xf32, #tpu.memory_space<vmem>>, vector<12x128xf32>
    tpu.vector_store %arg7[%c0_12, %c0_13], %11 {strides = array<i32>} : memref<12x128xf32, #tpu.memory_space<vmem>>, vector<12x128xf32>,
    return
  }
  func.func @transform_0(%arg0: i32) -> (i32, i32) {
    %c0_i32 = arith.constant 0 : i32
    %c0_i32_0 = arith.constant 0 : i32
    return %arg0, %c0_i32 : i32, i32
  }
  func.func @transform_1(%arg0: i32) -> (i32, i32) {
    %c0_i32 = arith.constant 0 : i32
    %c0_i32_0 = arith.constant 0 : i32
    %c0_i32_1 = arith.constant 0 : i32
    return %c0_i32, %c0_i32_0 : i32, i32
  }
  func.func @transform_2(%arg0: i32) -> (i32, i32) {
    %c0_i32 = arith.constant 0 : i32
    %c0_i32_0 = arith.constant 0 : i32
    %c0_i32_1 = arith.constant 0 : i32
    return %c0_i32, %c0_i32_0 : i32, i32
  }
  func.func @transform_3(%arg0: i32) -> (i32, i32) {
    %c0_i32 = arith.constant 0 : i32
    %c0_i32_0 = arith.constant 0 : i32
    %c0_i32_1 = arith.constant 0 : i32
    return %c0_i32, %c0_i32_0 : i32, i32
  }
  func.func @transform_4(%arg0: i32) -> (i32, i32) {
    %c0_i32 = arith.constant 0 : i32
    %c0_i32_0 = arith.constant 0 : i32
    %c0_i32_1 = arith.constant 0 : i32
    return %c0_i32, %c0_i32_0 : i32, i32
  }
  func.func @transform_5(%arg0: i32) -> (i32, i32) {
    %c0_i32 = arith.constant 0 : i32
    %c0_i32_0 = arith.constant 0 : i32
    return %arg0, %c0_i32 : i32, i32
  }
  func.func @transform_6(%arg0: i32) -> (i32, i32) {
    %c0_i32 = arith.constant 0 : i32
    %c0_i32_0 = arith.constant 0 : i32
    return %arg0, %c0_i32 : i32, i32
  }
}

</mosaic_0001>

<llo_original>
// kernel: tpu_custom_call.1
$region0: #{tpu_custom_call.1}
  #allocation0 [shape = 'u32[]', space=smem, size = 0x4, offset = 0x4, fixed_abs, tag = 'smem constant byte address 0x4 - core index']
  #allocation1 [shape = 'u32[144,128]{1,0:T(1,128)}', space=vmem, size = 0x12000, scoped, tag = 'internal scratch']
  %s0 = inlined_call_operand.hbm [shape: f32[12,12], index: 0, kind: input, shape index: {}]
  %s1 = inlined_call_operand.hbm [shape: f32[12,128], index: 1, kind: input, shape index: {}]
  %s2 = inlined_call_operand.vmem [shape: f32[1,128], index: 2, kind: input, shape index: {}]
  %s3 = inlined_call_operand.hbm [shape: f32[128,128], index: 3, kind: input, shape index: {}]
  %s4 = inlined_call_operand.vmem [shape: f32[1,128], index: 4, kind: input, shape index: {}]
  %s5 = inlined_call_operand.hbm [shape: f32[12,128], index: 5, kind: output, shape index: {0}]
  %s6 = inlined_call_operand.hbm [shape: f32[12,128], index: 6, kind: output, shape index: {1}]
  %7 = xla_tuple %s5, %s6
  %s8 = sld [smem:[#allocation0]]
  $region50: #{tpu_custom_call.1} parent=0
    _
  %s10 = ssub.s32 1, %s8
  %s11 = scalar_select 0, %s10, %s8
  $region1: #{tpu_custom_call.1} parent=0
    #allocation2 [shape = 'u8[8192]{0}', space=vmem, size = 0x2000, scoped, tag = 'input window, operand 0, single buffered']
    #allocation3 [shape = 's32[1]{0}', space=sflag, size = 0x4, scoped, tag = 'scoped memory for tpu_custom_call.1']
    #allocation4 [shape = 's32[1]{0}', space=sflag, size = 0x4, scoped, tag = 'scoped memory for tpu_custom_call.1']
    #allocation5 [shape = 'u8[8192]{0}', space=vmem, size = 0x2000, scoped, tag = 'input window, operand 1, single buffered']
    #allocation6 [shape = 's32[1]{0}', space=sflag, size = 0x4, scoped, tag = 'scoped memory for tpu_custom_call.1']
    #allocation7 [shape = 'u8[65536]{0}', space=vmem, size = 0x10000, scoped, tag = 'input window, operand 3, single buffered']
    #allocation8 [shape = 'u8[8192]{0}', space=vmem, size = 0x2000, scoped, tag = 'output window, operand 0, single buffered']
    #allocation9 [shape = 'u8[8192]{0}', space=vmem, size = 0x2000, scoped, tag = 'output window, operand 1, single buffered']
    #allocation10 [shape = 's32[1]{0}', space=sflag, size = 0x4, scoped, tag = 'scoped memory for tpu_custom_call.1']
    %12 = vsyncpa [#allocation3], 0
    %13 = vsyncpa [#allocation6], 0
    %14 = vsyncpa [#allocation4], 0
    %15 = vsyncpa [#allocation10], 0
    // Predicated region
    $region2: #{tpu_custom_call.1} parent=1 // pred_check
      _
    $region3: #{tpu_custom_call.1} parent=1 // pred_check_branch
      %17 = sbr.rel (0) target = $region5
    $region4: #{tpu_custom_call.1} parent=1 // pred_region
      %s19 = ssub.s32 256, 256
      %20 = vsyncadd [#allocation3], %s19
      %s21 = sshll.u32 [#allocation2], 4
      %s22 = int_to_ptr.vmem [resolvable:$true] %s21
      %27 = dma.hbm_to_vmem [thread:$0]  %s0, 256, %s22, [#allocation3], 128, 128, 8
    $region5: #{tpu_custom_call.1} parent=1 // pred_fallthru
      _
    // Predicated region
    $region6: #{tpu_custom_call.1} parent=1 // pred_check
      _
    $region7: #{tpu_custom_call.1} parent=1 // pred_check_branch
      %29 = sbr.rel (0) target = $region9
    $region8: #{tpu_custom_call.1} parent=1 // pred_region
      %s31 = ssub.s32 256, 256
      %32 = vsyncadd [#allocation6], %s31
      %s33 = sshll.u32 [#allocation5], 4
      %s34 = int_to_ptr.vmem [resolvable:$true] %s33
      %39 = dma.hbm_to_vmem [thread:$0]  %s1, 256, %s34, [#allocation6], 128, 128, 8
    $region9: #{tpu_custom_call.1} parent=1 // pred_fallthru
      _
    // Predicated region
    $region10: #{tpu_custom_call.1} parent=1 // pred_check
      _
    $region11: #{tpu_custom_call.1} parent=1 // pred_check_branch
      %41 = sbr.rel (0) target = $region13
    $region12: #{tpu_custom_call.1} parent=1 // pred_region
      _
    $region13: #{tpu_custom_call.1} parent=1 // pred_fallthru
      _
    // Predicated region
    $region14: #{tpu_custom_call.1} parent=1 // pred_check
      _
    $region15: #{tpu_custom_call.1} parent=1 // pred_check_branch
      %43 = sbr.rel (0) target = $region17
    $region16: #{tpu_custom_call.1} parent=1 // pred_region
      %s45 = ssub.s32 2048, 2048
      %46 = vsyncadd [#allocation6], %s45
      %s47 = sshll.u32 [#allocation7], 4
      %s48 = int_to_ptr.vmem [resolvable:$true] %s47
      %53 = dma.hbm_to_vmem [thread:$0]  %s3, 2048, %s48, [#allocation6], 128, 128, 8
    $region17: #{tpu_custom_call.1} parent=1 // pred_fallthru
      _
    // Predicated region
    $region18: #{tpu_custom_call.1} parent=1 // pred_check
      _
    $region19: #{tpu_custom_call.1} parent=1 // pred_check_branch
      %55 = sbr.rel (0) target = $region21
    $region20: #{tpu_custom_call.1} parent=1 // pred_region
      _
    $region21: #{tpu_custom_call.1} parent=1 // pred_fallthru
      _
    // Predicated region
    $region22: #{tpu_custom_call.1} parent=1 // pred_check
      _
    $region23: #{tpu_custom_call.1} parent=1 // pred_check_branch
      %57 = sbr.rel (0) target = $region25
    $region24: #{tpu_custom_call.1} parent=1 // pred_region
      %58 = dma.done [#allocation3], 256
    $region25: #{tpu_custom_call.1} parent=1 // pred_fallthru
      _
    // Predicated region
    $region26: #{tpu_custom_call.1} parent=1 // pred_check
      _
    $region27: #{tpu_custom_call.1} parent=1 // pred_check_branch
      %60 = sbr.rel (0) target = $region29
    $region28: #{tpu_custom_call.1} parent=1 // pred_region
      %61 = dma.done [#allocation6], 256
    $region29: #{tpu_custom_call.1} parent=1 // pred_fallthru
      _
    // Predicated region
    $region30: #{tpu_custom_call.1} parent=1 // pred_check
      _
    $region31: #{tpu_custom_call.1} parent=1 // pred_check_branch
      %63 = sbr.rel (0) target = $region33
    $region32: #{tpu_custom_call.1} parent=1 // pred_region
      %64 = dma.done [#allocation6], 2048
    $region33: #{tpu_custom_call.1} parent=1 // pred_fallthru
      _
    %v65 = vld [vmem:[#allocation2] sm:$0xff]
    %v66 = vld [vmem:[#allocation2 + $0x8] sm:$0xf]
    %v67 = vld [vmem:[#allocation5] sm:$0xff]
    %v68 = vld [vmem:[#allocation5 + $0x8] sm:$0xf]
    %v69 = vld [vmem:[%s2] sm:$0x1]
    %v71 = vlaneseq
    %v72 = vshrl.u32 %v71, 7
    %v73 = vsub.s32 0, %v72
    %v74 = vrot.slane %v69, %v73
    %vm76 = vcmask 97280
    %v78 = vsel %vm76, %v65, 0
    %v81 = vsel %vm76, %v66, 0
    %vm83 = vcmask 1043456
    %v85 = vsel %vm83, %v68, 0
    %87 = vmatprep.subr.mxu0 0.0
    %88 = vmatpush1.msra.mxu0 %v67
    %89 = vmatprep.subr.mxu0 0.0
    %90 = vmatpush1.msra.mxu0 %v85
    %91 = vmatprep.subr.mxu0 0.0
    %92 = vmatpush1.msra.mxu0 0.0
    %93 = vmatprep.subr.mxu0 0.0
    %94 = vmatpush1.msra.mxu0 0.0
    %95 = vmatprep.subr.mxu0 0.0
    %96 = vmatpush1.msra.mxu0 0.0
    %97 = vmatprep.subr.mxu0 0.0
    %98 = vmatpush1.msra.mxu0 0.0
    %99 = vmatprep.subr.mxu0 0.0
    %100 = vmatpush1.msra.mxu0 0.0
    %101 = vmatprep.subr.mxu0 0.0
    %102 = vmatpush1.msra.mxu0 0.0
    %103 = vmatprep.subr.mxu0 0.0
    %104 = vmatpush1.msra.mxu0 0.0
    %105 = vmatprep.subr.mxu0 0.0
    %106 = vmatpush1.msra.mxu0 0.0
    %107 = vmatprep.subr.mxu0 0.0
    %108 = vmatpush1.msra.mxu0 0.0
    %109 = vmatprep.subr.mxu0 0.0
    %110 = vmatpush1.msra.mxu0 0.0
    %111 = vmatprep.subr.mxu0 0.0
    %112 = vmatpush1.msra.mxu0 0.0
    %113 = vmatprep.subr.mxu0 0.0
    %114 = vmatpush1.msra.mxu0 0.0
    %115 = vmatprep.subr.mxu0 0.0
    %116 = vmatpush1.msra.mxu0 0.0
    %117 = vmatprep.subr.mxu0 0.0
    %118 = vmatpush1.msra.mxu0 0.0
    %119 = vmatprep.subr.mxu0 0.0
    %120 = vmatpush1.msra.mxu0 0.0
    %121 = vmatprep.subr.mxu0 0.0
    %122 = vmatpush1.msra.mxu0 0.0
    %123 = vmatprep.subr.mxu0 0.0
    %124 = vmatpush1.msra.mxu0 0.0
    %125 = vmatprep.subr.mxu0 0.0
    %126 = vmatpush1.msra.mxu0 0.0
    %127 = vmatprep.subr.mxu0 0.0
    %128 = vmatpush1.msra.mxu0 0.0
    %129 = vmatprep.subr.mxu0 0.0
    %130 = vmatpush1.msra.mxu0 0.0
    %131 = vmatprep.subr.mxu0 0.0
    %132 = vmatpush1.msra.mxu0 0.0
    %133 = vmatprep.subr.mxu0 0.0
    %134 = vmatpush1.msra.mxu0 0.0
    %135 = vmatprep.subr.mxu0 0.0
    %136 = vmatpush1.msra.mxu0 0.0
    %137 = vmatprep.subr.mxu0 0.0
    %138 = vmatpush1.msra.mxu0 0.0
    %139 = vmatprep.subr.mxu0 0.0
    %140 = vmatpush1.msra.mxu0 0.0
    %141 = vmatprep.subr.mxu0 0.0
    %142 = vmatpush1.msra.mxu0 0.0
    %143 = vmatprep.subr.mxu0 0.0
    %144 = vmatpush1.msra.mxu0 0.0
    %145 = vmatprep.subr.mxu0 0.0
    %146 = vmatpush1.msra.mxu0 0.0
    %147 = vmatprep.subr.mxu0 0.0
    %148 = vmatpush1.msra.mxu0 0.0
    %149 = vmatprep.subr.mxu0 0.0
    %150 = vmatpush1.msra.mxu0 0.0
    %151 = vmatprep.mubr.f32.mxu0 0.0
    %152 = vmatmul.mubr.f32.gmra.mrb[0].mxu0 %v78
    %v153 = vpop.f32.mrb[0].mxu0
    %v154 = vadd.f32 %v74, %v153
    %v155 = vpop.f32.mrb[0].mxu0
    %156 = vmatprep.mubr.f32.mxu0 0.0
    %157 = vmatmul.mubr.f32.gmra.mrb[0].mxu0 %v81
    %v158 = vpop.f32.mrb[0].mxu0
    %v159 = vadd.f32 %v74, %v158
    %v160 = vpop.f32.mrb[0].mxu0
    %161 = vdwg.mxu0
    %162 = vst [vmem:[#allocation8] sm:$0xff] %v154
    %163 = vst [vmem:[#allocation8 + $0x8] sm:$0xf] %v159
    %v164 = vld [vmem:[#allocation7] sm:$0xff]
    %v165 = vld [vmem:[#allocation7 + $0x8] sm:$0xff]
    %v166 = vld [vmem:[#allocation7 + $0x10] sm:$0xff]
    %v167 = vld [vmem:[#allocation7 + $0x18] sm:$0xff]
    %v168 = vld [vmem:[#allocation7 + $0x20] sm:$0xff]
    %v169 = vld [vmem:[#allocation7 + $0x28] sm:$0xff]
    %v170 = vld [vmem:[#allocation7 + $0x30] sm:$0xff]
    %v171 = vld [vmem:[#allocation7 + $0x38] sm:$0xff]
    %v172 = vld [vmem:[#allocation7 + $0x40] sm:$0xff]
    %v173 = vld [vmem:[#allocation7 + $0x48] sm:$0xff]
    %v174 = vld [vmem:[#allocation7 + $0x50] sm:$0xff]
    %v175 = vld [vmem:[#allocation7 + $0x58] sm:$0xff]
    %v176 = vld [vmem:[#allocation7 + $0x60] sm:$0xff]
    %v177 = vld [vmem:[#allocation7 + $0x68] sm:$0xff]
    %v178 = vld [vmem:[#allocation7 + $0x70] sm:$0xff]
    %v179 = vld [vmem:[#allocation7 + $0x78] sm:$0xff]
    %v180 = vld [vmem:[%s4] sm:$0x1]
    %v182 = vlaneseq
    %v183 = vshrl.u32 %v182, 7
    %v184 = vsub.s32 0, %v183
    %v185 = vrot.slane %v180, %v184
    %187 = vmatprep.subr.mxu0 0.0
    %188 = vmatpush1.msra.mxu0 %v164
    %189 = vmatprep.subr.mxu0 0.0
    %190 = vmatpush1.msra.mxu0 %v165
    %191 = vmatprep.subr.mxu0 0.0
    %192 = vmatpush1.msra.mxu0 %v166
    %193 = vmatprep.subr.mxu0 0.0
    %194 = vmatpush1.msra.mxu0 %v167
    %195 = vmatprep.subr.mxu0 0.0
    %196 = vmatpush1.msra.mxu0 %v168
    %197 = vmatprep.subr.mxu0 0.0
    %198 = vmatpush1.msra.mxu0 %v169
    %199 = vmatprep.subr.mxu0 0.0
    %200 = vmatpush1.msra.mxu0 %v170
    %201 = vmatprep.subr.mxu0 0.0
    %202 = vmatpush1.msra.mxu0 %v171
    %203 = vmatprep.subr.mxu0 0.0
    %204 = vmatpush1.msra.mxu0 %v172
    %205 = vmatprep.subr.mxu0 0.0
    %206 = vmatpush1.msra.mxu0 %v173
    %207 = vmatprep.subr.mxu0 0.0
    %208 = vmatpush1.msra.mxu0 %v174
    %209 = vmatprep.subr.mxu0 0.0
    %210 = vmatpush1.msra.mxu0 %v175
    %211 = vmatprep.subr.mxu0 0.0
    %212 = vmatpush1.msra.mxu0 %v176
    %213 = vmatprep.subr.mxu0 0.0
    %214 = vmatpush1.msra.mxu0 %v177
    %215 = vmatprep.subr.mxu0 0.0
    %216 = vmatpush1.msra.mxu0 %v178
    %217 = vmatprep.subr.mxu0 0.0
    %218 = vmatpush1.msra.mxu0 %v179
    %219 = vmatprep.subr.mxu0 0.0
    %220 = vmatpush1.msra.mxu0 0.0
    %221 = vmatprep.subr.mxu0 0.0
    %222 = vmatpush1.msra.mxu0 0.0
    %223 = vmatprep.subr.mxu0 0.0
    %224 = vmatpush1.msra.mxu0 0.0
    %225 = vmatprep.subr.mxu0 0.0
    %226 = vmatpush1.msra.mxu0 0.0
    %227 = vmatprep.subr.mxu0 0.0
    %228 = vmatpush1.msra.mxu0 0.0
    %229 = vmatprep.subr.mxu0 0.0
    %230 = vmatpush1.msra.mxu0 0.0
    %231 = vmatprep.subr.mxu0 0.0
    %232 = vmatpush1.msra.mxu0 0.0
    %233 = vmatprep.subr.mxu0 0.0
    %234 = vmatpush1.msra.mxu0 0.0
    %235 = vmatprep.subr.mxu0 0.0
    %236 = vmatpush1.msra.mxu0 0.0
    %237 = vmatprep.subr.mxu0 0.0
    %238 = vmatpush1.msra.mxu0 0.0
    %239 = vmatprep.subr.mxu0 0.0
    %240 = vmatpush1.msra.mxu0 0.0
    %241 = vmatprep.subr.mxu0 0.0
    %242 = vmatpush1.msra.mxu0 0.0
    %243 = vmatprep.subr.mxu0 0.0
    %244 = vmatpush1.msra.mxu0 0.0
    %245 = vmatprep.subr.mxu0 0.0
    %246 = vmatpush1.msra.mxu0 0.0
    %247 = vmatprep.subr.mxu0 0.0
    %248 = vmatpush1.msra.mxu0 0.0
    %249 = vmatprep.subr.mxu0 0.0
    %250 = vmatpush1.msra.mxu0 0.0
    %251 = vmatprep.mubr.f32.mxu0 0.0
    %252 = vmatmul.mubr.f32.gmra.mrb[0].mxu0 %v154
    %v253 = vpop.f32.mrb[0].mxu0
    %v254 = vadd.f32 %v185, %v253
    %v255 = vpop.f32.mrb[0].mxu0
    %256 = vmatprep.mubr.f32.mxu0 0.0
    %257 = vmatmul.mubr.f32.gmra.mrb[0].mxu0 %v159
    %v258 = vpop.f32.mrb[0].mxu0
    %v259 = vadd.f32 %v185, %v258
    %v260 = vpop.f32.mrb[0].mxu0
    %261 = vdwg.mxu0
    %262 = vst [vmem:[#allocation9] sm:$0xff] %v254
    %263 = vst [vmem:[#allocation9 + $0x8] sm:$0xf] %v259
    // Predicated region
    $region34: #{tpu_custom_call.1} parent=1 // pred_check
      _
    $region35: #{tpu_custom_call.1} parent=1 // pred_check_branch
      %265 = sbr.rel (0) target = $region37
    $region36: #{tpu_custom_call.1} parent=1 // pred_region
      %s267 = ssub.s32 256, 256
      %268 = vsyncadd [#allocation4], %s267
      %s269 = sshll.u32 [#allocation8], 4
      %s270 = int_to_ptr.vmem [resolvable:$true] %s269
      %275 = dma.vmem_to_hbm [thread:$0]  %s270, 256, %s5, [#allocation4], 128, 128, 8
    $region37: #{tpu_custom_call.1} parent=1 // pred_fallthru
      _
    // Predicated region
    $region38: #{tpu_custom_call.1} parent=1 // pred_check
      _
    $region39: #{tpu_custom_call.1} parent=1 // pred_check_branch
      %277 = sbr.rel (0) target = $region41
    $region40: #{tpu_custom_call.1} parent=1 // pred_region
      %s279 = ssub.s32 256, 256
      %280 = vsyncadd [#allocation10], %s279
      %s281 = sshll.u32 [#allocation9], 4
      %s282 = int_to_ptr.vmem [resolvable:$true] %s281
      %287 = dma.vmem_to_hbm [thread:$0]  %s282, 256, %s6, [#allocation10], 128, 128, 8
    $region41: #{tpu_custom_call.1} parent=1 // pred_fallthru
      _
    // Predicated region
    $region42: #{tpu_custom_call.1} parent=1 // pred_check
      _
    $region43: #{tpu_custom_call.1} parent=1 // pred_check_branch
      %289 = sbr.rel (0) target = $region45
    $region44: #{tpu_custom_call.1} parent=1 // pred_region
      %290 = dma.done [#allocation4], 256
    $region45: #{tpu_custom_call.1} parent=1 // pred_fallthru
      _
    // Predicated region
    $region46: #{tpu_custom_call.1} parent=1 // pred_check
      _
    $region47: #{tpu_custom_call.1} parent=1 // pred_check_branch
      %292 = sbr.rel (0) target = $region49
    $region48: #{tpu_custom_call.1} parent=1 // pred_region
      %293 = dma.done [#allocation10], 256
    $region49: #{tpu_custom_call.1} parent=1 // pred_fallthru
      _
    %294 = vsyncpa [#allocation3], 1
    %295 = vsyncpa [#allocation6], 1
    %296 = vsyncpa [#allocation4], 1
    %297 = vsyncpa [#allocation10], 1

</llo_original>
